<compile_context>
chip_gen: v7x
topology: tpu7x:2x2x1
jax: 0.10.0
libtpu: 0.0.40
codegen_flags: <defaults>
</compile_context>

<pallas_src>
import jax
import jax.numpy as jnp
from jax import lax
from jax.experimental import pallas as pl
from jax.experimental.pallas import tpu as pltpu


def _pick_pixel_tile(H, W, max_tile):
    """Largest pixel tile TP = th*W (th | H) with TP % 128 == 0 and TP >= 2W+2."""
    candidates = []
    for th in range(1, H + 1):
        if H % th:
            continue
        tp = th * W
        if tp % 128 == 0 and tp >= 2 * W + 2:
            candidates.append(tp)
    if not candidates:
        raise ValueError(f"no valid pixel tile for H={H}, W={W}")
    within = [tp for tp in candidates if tp <= max_tile]
    return max(within) if within else min(candidates)


def duc_forward(x_nchw, weight, bias, up_factor, *, max_pixel_tile=512):
    """x_nchw: (N, Cin, H, W), weight: (Cout, Cin, 3, 3), bias: (Cout,)."""
    N, Cin, H, W = x_nchw.shape
    Cout = weight.shape[0]
    HW = H * W
    TP = _pick_pixel_tile(H, W, max_pixel_tile)
    n_tiles = HW // TP

    # ---- glue: H-pad, flatten rows, add 1 left guard + (TP - 2W - 1) right guard ----
    # Value needed by output pixel p for tap (kh, kw) is xf[:, :, p + kh*W + kw];
    # column-boundary wraparound for kw in {0, 2} is masked inside the kernel.
    xp = jnp.pad(x_nchw, ((0, 0), (0, 0), (1, 1), (0, 0)))        # (N, Cin, H+2, W)
    xf = xp.reshape(N, Cin, (H + 2) * W)
    xf = jnp.pad(xf, ((0, 0), (0, 0), (1, TP - 2 * W - 1)))       # (N, Cin, HW + TP)
    xf = xf.astype(jnp.bfloat16)

    # W_mat[co, (kh*3+kw)*Cin + ci] = weight[co, ci, kh, kw]
    w_mat = jnp.transpose(weight, (0, 2, 3, 1)).reshape(Cout, 9 * Cin).astype(jnp.bfloat16)
    b_col = bias.reshape(Cout, 1).astype(jnp.float32)

    def kernel(xa_ref, xb_ref, w_ref, b_ref, o_ref):
        # xa_ref/xb_ref: (1, Cin, TP) flat-padded strips at block j and j+1 (halo).
        # w_ref: (Cout, 9*Cin) bf16, b_ref: (Cout, 1) f32, o_ref: (1, Cout, TP).
        cin = xa_ref.shape[1]
        xcat = jnp.concatenate([xa_ref[0], xb_ref[0]], axis=-1)    # (Cin, 2*TP)

        # Pixel column index within its image row (TP is a multiple of W -> static).
        col = lax.broadcasted_iota(jnp.int32, (cin, TP), 1) % W
        not_left = col != 0
        not_right = col != (W - 1)

        taps = []
        for kh in range(3):
            for kw in range(3):
                off = kh * W + kw                                  # static lane offset
                t = xcat[:, off:off + TP]
                if kw == 0:                                        # zero-pad at w == 0
                    t = jnp.where(not_left, t, jnp.zeros_like(t))
                elif kw == 2:                                      # zero-pad at w == W-1
                    t = jnp.where(not_right, t, jnp.zeros_like(t))
                taps.append(t)
        xcol = jnp.concatenate(taps, axis=0)                       # (9*Cin, TP) bf16

        # Single K = 9*Cin matmul; pixels on the MXU output-minor / lane axis.
        y = jnp.dot(w_ref[...], xcol, preferred_element_type=jnp.float32)  # (Cout, TP)
        y = y + b_ref[...]
        o_ref[0] = y.astype(o_ref.dtype)

    flops = 2 * N * HW * 9 * Cin * Cout
    bytes_accessed = (2 * N * Cin * (HW + TP) * 2        # activations, read ~2x, bf16
                      + Cout * 9 * Cin * 2 + Cout * 4    # weights + bias (resident)
                      + N * Cout * HW * 4)               # f32 output

    y = pl.pallas_call(
        kernel,
        out_shape=jax.ShapeDtypeStruct((N, Cout, HW), x_nchw.dtype),
        grid_spec=pltpu.PrefetchScalarGridSpec(
            num_scalar_prefetch=0,
            grid=(N, n_tiles),
            in_specs=[
                pl.BlockSpec((1, Cin, TP), lambda n, j: (n, 0, j)),
                pl.BlockSpec((1, Cin, TP), lambda n, j: (n, 0, j + 1)),
                pl.BlockSpec((Cout, 9 * Cin), lambda n, j: (0, 0)),
                pl.BlockSpec((Cout, 1), lambda n, j: (0, 0)),
            ],
            out_specs=pl.BlockSpec((1, Cout, TP), lambda n, j: (n, 0, j)),
        ),
        compiler_params=pltpu.CompilerParams(
            dimension_semantics=("parallel", "parallel"),
            vmem_limit_bytes=32 * 1024 * 1024,
        ),
        cost_estimate=pl.CostEstimate(
            flops=flops, transcendentals=0, bytes_accessed=bytes_accessed),
    )(xf, xf, w_mat, b_col)                                        # (N, Cout, HW)

    # ---- glue: PixelShuffle(r): (N, C*r^2, H, W) -> (N, C, H*r, W*r) ----
    # TODO(synk): fold the lane-interleave into the out_spec store path; kept as XLA
    # layout glue for lowering robustness.
    r = up_factor
    C = Cout // (r * r)
    y = y.reshape(N, C, r, r, H, W)            # channel k = c*r^2 + i*r + j
    y = jnp.transpose(y, (0, 1, 4, 2, 5, 3))   # (N, C, H, r, W, r)
    return y.reshape(N, C, H * r, W * r)


def duc_reference(x_nchw, weight, bias, up_factor):
    """Plain-JAX reference matching PyTorch DUC.forward semantics."""
    N, Cin, H, W = x_nchw.shape
    Cout = weight.shape[0]
    r = up_factor
    C = Cout // (r * r)
    y = lax.conv_general_dilated(
        x_nchw, weight, window_strides=(1, 1), padding=((1, 1), (1, 1)),
        dimension_numbers=("NCHW", "OIHW", "NCHW"))
    y = y + bias[None, :, None, None]
    y = y.reshape(N, C, r, r, H, W)
    y = jnp.transpose(y, (0, 1, 4, 2, 5, 3))
    return y.reshape(N, C, H * r, W * r)


if __name__ == "__main__":
    # Small, DUC-consistent shapes: batch=2, in_channels=4, spatial=16, up_factor=2.
    # (ResNet_HDC / ASPP / 1x1 head of CoralSegmentationModel are outside this kernel.)
    N, Cin, H, W = 2, 4, 16, 16
    up_factor = 2
    Cout = Cin * up_factor ** 2

    key = jax.random.PRNGKey(0)
    kx, kw, kb = jax.random.split(key, 3)
    x = jax.random.normal(kx, (N, Cin, H, W), dtype=jnp.float32)
    weight = jax.random.normal(kw, (Cout, Cin, 3, 3), dtype=jnp.float32) * 0.1
    bias = jax.random.normal(kb, (Cout,), dtype=jnp.float32) * 0.1

    out = jax.block_until_ready(duc_forward(x, weight, bias, up_factor))
    ref = duc_reference(x, weight, bias, up_factor)

    assert out.shape == (N, Cin, H * up_factor, W * up_factor)
    max_err = float(jnp.max(jnp.abs(out - ref)))
    # bf16 MXU matmul vs f32-ish XLA conv reference -> loose tolerance.
    assert jnp.allclose(out, ref, atol=5e-2, rtol=5e-2), max_err

    print("KERNEL_OK")
</pallas_src>

<mosaic_0001>
module attributes {stable_mosaic.version = 11 : i64} {
  func.func @kernel(%arg0: i32, %arg1: i32, %arg2: memref<1x4x256xbf16, #tpu.memory_space<vmem>>, %arg3: memref<1x4x256xbf16, #tpu.memory_space<vmem>>, %arg4: memref<16x36xbf16, #tpu.memory_space<vmem>>, %arg5: memref<16x1xf32, #tpu.memory_space<vmem>>, %arg6: memref<1x16x256xf32, #tpu.memory_space<vmem>>) attributes {dimension_semantics = [#tpu.dimension_semantics<parallel>, #tpu.dimension_semantics<parallel>], iteration_bounds = array<i64: 2, 1>, scalar_prefetch = 0 : i64, scratch_operands = 0 : i64, tpu.core_type = #tpu.core_type<tc>, window_params = [{transform_indices = @transform_0, window_bounds = array<i64: 1, 4, 256>}, {transform_indices = @transform_1, window_bounds = array<i64: 1, 4, 256>}, {pipeline_mode = #tpu.pipeline_mode<synchronous>, transform_indices = @transform_2, window_bounds = array<i64: 16, 36>}, {pipeline_mode = #tpu.pipeline_mode<synchronous>, transform_indices = @transform_3, window_bounds = array<i64: 16, 1>}, {transform_indices = @transform_4, window_bounds = array<i64: 1, 16, 256>}]} {
    %c0 = arith.constant 0 : index
    %c0_0 = arith.constant 0 : index
    %c0_1 = arith.constant 0 : index
    %0 = vector.load %arg2[%c0, %c0_0, %c0_1] : memref<1x4x256xbf16, #tpu.memory_space<vmem>>, vector<1x4x256xbf16>
    %1 = vector.shape_cast %0 : vector<1x4x256xbf16> to vector<4x256xbf16>
    %c0_2 = arith.constant 0 : index
    %c0_3 = arith.constant 0 : index
    %c0_4 = arith.constant 0 : index
    %2 = vector.load %arg3[%c0_2, %c0_3, %c0_4] : memref<1x4x256xbf16, #tpu.memory_space<vmem>>, vector<1x4x256xbf16>
    %3 = vector.shape_cast %2 : vector<1x4x256xbf16> to vector<4x256xbf16>
    %4 = tpu.concatenate %1, %3 in 1 : vector<4x256xbf16>, vector<4x256xbf16> -> vector<4x512xbf16>
    %5 = tpu.iota {dimensions = array<i32: 1>} : vector<4x256xi32>
    %c16_i32 = arith.constant 16 : i32
    %c0_i32 = arith.constant 0 : i32
    %6 = arith.cmpi eq, %c16_i32, %c0_i32 : i32
    %c1_i32 = arith.constant 1 : i32
    %7 = arith.select %6, %c1_i32, %c16_i32 : i32
    %8 = vector.broadcast %7 : i32 to vector<4x256xi32>
    %9 = arith.remsi %5, %8 : vector<4x256xi32>
    %c0_i32_5 = arith.constant 0 : i32
    %10 = vector.broadcast %c0_i32_5 : i32 to vector<4x256xi32>
    %11 = arith.cmpi ne, %9, %10 : vector<4x256xi32>
    %c0_i32_6 = arith.constant 0 : i32
    %12 = vector.broadcast %c0_i32_6 : i32 to vector<4x256xi32>
    %13 = arith.cmpi slt, %9, %12 : vector<4x256xi32>
    %c0_i32_7 = arith.constant 0 : i32
    %14 = arith.cmpi slt, %7, %c0_i32_7 : i32
    %15 = vector.broadcast %14 : i1 to vector<4x256xi1>
    %16 = vector.broadcast %15 : vector<4x256xi1> to vector<4x256xi1>
    %17 = arith.xori %13, %16 : vector<4x256xi1>
    %18 = arith.andi %17, %11 : vector<4x256xi1>
    %19 = vector.broadcast %7 : i32 to vector<4x256xi32>
    %20 = arith.addi %9, %19 : vector<4x256xi32>
    %21 = arith.select %18, %20, %9 : vector<4x256xi1>, vector<4x256xi32>
    %c0_i32_8 = arith.constant 0 : i32
    %22 = vector.broadcast %c0_i32_8 : i32 to vector<4x256xi32>
    %23 = arith.cmpi ne, %21, %22 : vector<4x256xi32>
    %c15_i32 = arith.constant 15 : i32
    %24 = vector.broadcast %c15_i32 : i32 to vector<4x256xi32>
    %25 = arith.cmpi ne, %21, %24 : vector<4x256xi32>
    %26 = vector.extract_strided_slice %4 {offsets = [0, 0], sizes = [4, 256], strides = [1, 1]} : vector<4x512xbf16> to vector<4x256xbf16>
    %cst = arith.constant 0.000000e+00 : bf16
    %27 = vector.broadcast %cst : bf16 to vector<4x256xbf16>
    %28 = arith.select %23, %26, %27 : vector<4x256xi1>, vector<4x256xbf16>
    %29 = vector.extract_strided_slice %4 {offsets = [0, 1], sizes = [4, 256], strides = [1, 1]} : vector<4x512xbf16> to vector<4x256xbf16>
    %30 = vector.extract_strided_slice %4 {offsets = [0, 2], sizes = [4, 256], strides = [1, 1]} : vector<4x512xbf16> to vector<4x256xbf16>
    %cst_9 = arith.constant 0.000000e+00 : bf16
    %31 = vector.broadcast %cst_9 : bf16 to vector<4x256xbf16>
    %32 = arith.select %25, %30, %31 : vector<4x256xi1>, vector<4x256xbf16>
    %33 = vector.extract_strided_slice %4 {offsets = [0, 16], sizes = [4, 256], strides = [1, 1]} : vector<4x512xbf16> to vector<4x256xbf16>
    %cst_10 = arith.constant 0.000000e+00 : bf16
    %34 = vector.broadcast %cst_10 : bf16 to vector<4x256xbf16>
    %35 = arith.select %23, %33, %34 : vector<4x256xi1>, vector<4x256xbf16>
    %36 = vector.extract_strided_slice %4 {offsets = [0, 17], sizes = [4, 256], strides = [1, 1]} : vector<4x512xbf16> to vector<4x256xbf16>
    %37 = vector.extract_strided_slice %4 {offsets = [0, 18], sizes = [4, 256], strides = [1, 1]} : vector<4x512xbf16> to vector<4x256xbf16>
    %cst_11 = arith.constant 0.000000e+00 : bf16
    %38 = vector.broadcast %cst_11 : bf16 to vector<4x256xbf16>
    %39 = arith.select %25, %37, %38 : vector<4x256xi1>, vector<4x256xbf16>
    %40 = vector.extract_strided_slice %4 {offsets = [0, 32], sizes = [4, 256], strides = [1, 1]} : vector<4x512xbf16> to vector<4x256xbf16>
    %cst_12 = arith.constant 0.000000e+00 : bf16
    %41 = vector.broadcast %cst_12 : bf16 to vector<4x256xbf16>
    %42 = arith.select %23, %40, %41 : vector<4x256xi1>, vector<4x256xbf16>
    %43 = vector.extract_strided_slice %4 {offsets = [0, 33], sizes = [4, 256], strides = [1, 1]} : vector<4x512xbf16> to vector<4x256xbf16>
    %44 = vector.extract_strided_slice %4 {offsets = [0, 34], sizes = [4, 256], strides = [1, 1]} : vector<4x512xbf16> to vector<4x256xbf16>
    %cst_13 = arith.constant 0.000000e+00 : bf16
    %45 = vector.broadcast %cst_13 : bf16 to vector<4x256xbf16>
    %46 = arith.select %25, %44, %45 : vector<4x256xi1>, vector<4x256xbf16>
    %47 = tpu.concatenate %28, %29, %32, %35, %36, %39, %42, %43, %46 in 0 : vector<4x256xbf16>, vector<4x256xbf16>, vector<4x256xbf16>, vector<4x256xbf16>, vector<4x256xbf16>, vector<4x256xbf16>, vector<4x256xbf16>, vector<4x256xbf16>, vector<4x256xbf16> -> vector<36x256xbf16>
    %c0_14 = arith.constant 0 : index
    %c0_15 = arith.constant 0 : index
    %48 = vector.load %arg4[%c0_14, %c0_15] : memref<16x36xbf16, #tpu.memory_space<vmem>>, vector<16x36xbf16>
    %cst_16 = arith.constant dense<0.000000e+00> : vector<16x256xf32>
    %49 = tpu.matmul %48, %47, %cst_16 {dimension_numbers = #tpu.dot_dimension_numbers<[1], [0], [0], [1], [0, 0, 1, 1], [], []>} : vector<16x36xbf16>, vector<36x256xbf16>, vector<16x256xf32> -> vector<16x256xf32>
    %c0_17 = arith.constant 0 : index
    %c0_18 = arith.constant 0 : index
    %50 = vector.load %arg5[%c0_17, %c0_18] : memref<16x1xf32, #tpu.memory_space<vmem>>, vector<16x1xf32>
    %51 = vector.broadcast %50 : vector<16x1xf32> to vector<16x256xf32>
    %52 = arith.addf %49, %51 : vector<16x256xf32>
    %c0_19 = arith.constant 0 : index
    %c0_20 = arith.constant 0 : index
    %c0_21 = arith.constant 0 : index
    %53 = vector.load %arg6[%c0_19, %c0_20, %c0_21] : memref<1x16x256xf32, #tpu.memory_space<vmem>>, vector<1x16x256xf32>
    %54 = vector.shape_cast %53 : vector<1x16x256xf32> to vector<16x256xf32>
    %55 = vector.shape_cast %52 : vector<16x256xf32> to vector<1x16x256xf32>
    tpu.vector_store %arg6[%c0_19, %c0_20, %c0_21], %55 {strides = array<i32>} : memref<1x16x256xf32, #tpu.memory_space<vmem>>, vector<1x16x256xf32>,
    return
  }
  func.func @transform_0(%arg0: i32, %arg1: i32) -> (i32, i32, i32) {
    %c0_i32 = arith.constant 0 : i32
    %c0_i32_0 = arith.constant 0 : i32
    return %arg0, %c0_i32, %arg1 : i32, i32, i32
  }
  func.func @transform_1(%arg0: i32, %arg1: i32) -> (i32, i32, i32) {
    %c1_i32 = arith.constant 1 : i32
    %0 = arith.addi %arg1, %c1_i32 : i32
    %c0_i32 = arith.constant 0 : i32
    %c0_i32_0 = arith.constant 0 : i32
    return %arg0, %c0_i32, %0 : i32, i32, i32
  }
  func.func @transform_2(%arg0: i32, %arg1: i32) -> (i32, i32) {
    %c0_i32 = arith.constant 0 : i32
    %c0_i32_0 = arith.constant 0 : i32
    %c0_i32_1 = arith.constant 0 : i32
    return %c0_i32, %c0_i32_0 : i32, i32
  }
  func.func @transform_3(%arg0: i32, %arg1: i32) -> (i32, i32) {
    %c0_i32 = arith.constant 0 : i32
    %c0_i32_0 = arith.constant 0 : i32
    %c0_i32_1 = arith.constant 0 : i32
    return %c0_i32, %c0_i32_0 : i32, i32
  }
  func.func @transform_4(%arg0: i32, %arg1: i32) -> (i32, i32, i32) {
    %c0_i32 = arith.constant 0 : i32
    %c0_i32_0 = arith.constant 0 : i32
    return %arg0, %c0_i32, %arg1 : i32, i32, i32
  }
}

</mosaic_0001>

<llo_original>
// kernel: tpu_custom_call.1
$region0: #{tpu_custom_call.1}
  #allocation0 [shape = 'u32[]', space=smem, size = 0x4, offset = 0x4, fixed_abs, tag = 'smem constant byte address 0x4 - core index']
  #allocation1 [shape = 'u32[144,128]{1,0:T(1,128)}', space=vmem, size = 0x12000, scoped, tag = 'internal scratch']
  %s0 = inlined_call_operand.vmem [shape: bf16[2,4,512], index: 0, kind: input, shape index: {}]
  %s1 = inlined_call_operand.hbm [shape: bf16[2,4,512], index: 1, kind: input, shape index: {}]
  %s2 = inlined_call_operand.vmem [shape: bf16[16,36], index: 2, kind: input, shape index: {}]
  %s3 = inlined_call_operand.vmem [shape: f32[16,1], index: 3, kind: input, shape index: {}]
  %s4 = inlined_call_operand.hbm [shape: f32[2,16,256], index: 4, kind: output, shape index: {}]
  %s5 = sld [smem:[#allocation0]]
  $region53: #{tpu_custom_call.1} parent=0
    _
  %s7 = ssub.s32 1, %s5
  %s8 = scalar_select 0, %s7, %s5
  $region1: #{tpu_custom_call.1} parent=0
    #allocation2 [shape = 'u8[4096]{0}', space=vmem, size = 0x1000, scoped, tag = 'input window, operand 1']
    #allocation3 [shape = 's32[2]{0}', space=sflag, size = 0x8, scoped, tag = 'scoped memory for tpu_custom_call.1']
    #allocation4 [shape = 's32[2]{0}', space=sflag, size = 0x8, scoped, tag = 'scoped memory for tpu_custom_call.1']
    #allocation5 [shape = 'u8[32768]{0}', space=vmem, size = 0x8000, scoped, tag = 'output window, operand 0']
    %9 = vsyncpa [#allocation3], 0
    %s10 = scalar_lea.sflag [#allocation3], 1
    %11 = vsyncpa %s10, 0
    %12 = vsyncpa [#allocation4], 0
    %s13 = scalar_lea.sflag [#allocation4], 1
    %14 = vsyncpa %s13, 0
    loop: start=0, step=1, limit=4
    $region2: #{tpu_custom_call.1} parent=1 // loop_pre_header
      _
    $region3: #{tpu_custom_call.1} parent=1 // loop_header
      %s16 = sphi 0, %s20
      %p17 = scmp.ge.s32.totalorder %s16, 4
      %s23 = sphi 0, %s35
      %s24 = sphi 0, %s31
      %s25 = sphi 0, %s23
      %s26 = sphi 0, %s24
      %s27 = sphi 0, %s25
      %s28 = sphi 0, %s26
      %s40 = sphi 0, %s42
      %s43 = sphi 0, %s40
      %s44 = sphi 0, %s43
      %s60 = sphi 0, %s44
      %s70 = sphi 0, %s72
      %s73 = sphi 0, %s70
      %s74 = sphi 0, %s73
      %s90 = sphi 0, %s74
      %s94 = sphi 0, %s94
      %s96 = sphi 0, %s94
      %s97 = sphi 0, %s96
      %s111 = sphi 0, %s97
      %s115 = sphi 0, %s115
      %s117 = sphi 0, %s115
      %s118 = sphi 0, %s117
      %s132 = sphi 0, %s118
      %s140 = sphi 0, %s142
      %s143 = sphi 0, %s140
      %s144 = sphi 0, %s143
      %s160 = sphi 0, %s144
    $region4: #{tpu_custom_call.1} parent=1 // loop_header_branch
      %19 = sbr.rel (%p17) target = $region8
    $region5: #{tpu_custom_call.1} parent=1 // loop_body
      %s21 = ssub.s32 %s16, 1
      %s22 = ssub.s32 %s16, 2
      %s29 = sadd.s32 1, %s24
      %p30 = scmp.ge.s32.totalorder %s29, 1
      %s31 = scalar_select %p30, 0, %s29
      %s32 = sadd.s32 1, %s23
      %s33 = scalar_select %p30, %s32, %s23
      %p34 = scmp.ge.s32.totalorder %s33, 2
      %s35 = scalar_select %p34, 0, %s33
      %s36 = ssub.s32 %s23, %s35
      %s37 = ssub.s32 %s24, %s31
      %s38 = sor.u32 %s36, %s37
      %p39 = scmp.eq.s32.totalorder %s38, 0
      %s41 = sadd.s32 %s40, 1
      %s42 = scalar_select %p39, %s40, %s41
      %p45 = pneg %p39
      %p46 = scmp.eq.s32.totalorder %s16, 1
      %p47 = por %p45, %p46
      %p48 = scmp.ne.s32.totalorder %s40, %s43
      %p49 = scmp.eq.s32.totalorder %s16, 0
      %p50 = por %p48, %p49
      %p51 = scmp.ne.s32.totalorder %s40, %s43
      %p52 = scmp.eq.s32.totalorder %s21, 1
      %p53 = por %p51, %p52
      %p54 = scmp.ne.s32.totalorder %s43, %s44
      %p55 = scmp.eq.s32.totalorder %s21, 0
      %p56 = por %p54, %p55
      %p57 = scmp.ne.s32.totalorder %s43, %s44
      %p58 = scmp.eq.s32.totalorder %s22, 1
      %p59 = por %p57, %p58
      %p61 = scmp.ne.s32.totalorder %s44, %s60
      %p62 = scmp.eq.s32.totalorder %s22, 0
      %p63 = por %p61, %p62
      %s64 = sadd.s32 %s24, 1
      %s65 = sadd.s32 %s31, 1
      %s66 = ssub.s32 %s23, %s35
      %s67 = ssub.s32 %s64, %s65
      %s68 = sor.u32 %s66, %s67
      %p69 = scmp.eq.s32.totalorder %s68, 0
      %s71 = sadd.s32 %s70, 1
      %s72 = scalar_select %p69, %s70, %s71
      %p75 = pneg %p69
      %p76 = scmp.eq.s32.totalorder %s16, 1
      %p77 = por %p75, %p76
      %p78 = scmp.ne.s32.totalorder %s70, %s73
      %p79 = scmp.eq.s32.totalorder %s16, 0
      %p80 = por %p78, %p79
      %p81 = scmp.ne.s32.totalorder %s70, %s73
      %p82 = scmp.eq.s32.totalorder %s21, 1
      %p83 = por %p81, %p82
      %p84 = scmp.ne.s32.totalorder %s73, %s74
      %p85 = scmp.eq.s32.totalorder %s21, 0
      %p86 = por %p84, %p85
      %p87 = scmp.ne.s32.totalorder %s73, %s74
      %p88 = scmp.eq.s32.totalorder %s22, 1
      %p89 = por %p87, %p88
      %p91 = scmp.ne.s32.totalorder %s74, %s90
      %p92 = scmp.eq.s32.totalorder %s22, 0
      %p93 = por %p91, %p92
      %s95 = sadd.s32 %s94, 1
      %p98 = scmp.eq.s32.totalorder %s16, 1
      %p99 = scmp.ne.s32.totalorder %s94, %s96
      %p100 = scmp.eq.s32.totalorder %s16, 0
      %p101 = por %p99, %p100
      %p102 = scmp.ne.s32.totalorder %s94, %s96
      %p103 = scmp.eq.s32.totalorder %s21, 1
      %p104 = por %p102, %p103
      %p105 = scmp.ne.s32.totalorder %s96, %s97
      %p106 = scmp.eq.s32.totalorder %s21, 0
      %p107 = por %p105, %p106
      %p108 = scmp.ne.s32.totalorder %s96, %s97
      %p109 = scmp.eq.s32.totalorder %s22, 1
      %p110 = por %p108, %p109
      %p112 = scmp.ne.s32.totalorder %s97, %s111
      %p113 = scmp.eq.s32.totalorder %s22, 0
      %p114 = por %p112, %p113
      %s116 = sadd.s32 %s115, 1
      %p119 = scmp.eq.s32.totalorder %s16, 1
      %p120 = scmp.ne.s32.totalorder %s115, %s117
      %p121 = scmp.eq.s32.totalorder %s16, 0
      %p122 = por %p120, %p121
      %p123 = scmp.ne.s32.totalorder %s115, %s117
      %p124 = scmp.eq.s32.totalorder %s21, 1
      %p125 = por %p123, %p124
      %p126 = scmp.ne.s32.totalorder %s117, %s118
      %p127 = scmp.eq.s32.totalorder %s21, 0
      %p128 = por %p126, %p127
      %p129 = scmp.ne.s32.totalorder %s117, %s118
      %p130 = scmp.eq.s32.totalorder %s22, 1
      %p131 = por %p129, %p130
      %p133 = scmp.ne.s32.totalorder %s118, %s132
      %p134 = scmp.eq.s32.totalorder %s22, 0
      %p135 = por %p133, %p134
      %s136 = ssub.s32 %s23, %s35
      %s137 = ssub.s32 %s24, %s31
      %s138 = sor.u32 %s136, %s137
      %p139 = scmp.eq.s32.totalorder %s138, 0
      %s141 = sadd.s32 %s140, 1
      %s142 = scalar_select %p139, %s140, %s141
      %p145 = pneg %p139
      %p146 = scmp.eq.s32.totalorder %s16, 1
      %p147 = por %p145, %p146
      %p148 = scmp.ne.s32.totalorder %s140, %s143
      %p149 = scmp.eq.s32.totalorder %s16, 0
      %p150 = por %p148, %p149
      %p151 = scmp.ne.s32.totalorder %s140, %s143
      %p152 = scmp.eq.s32.totalorder %s21, 1
      %p153 = por %p151, %p152
      %p154 = scmp.ne.s32.totalorder %s143, %s144
      %p155 = scmp.eq.s32.totalorder %s21, 0
      %p156 = por %p154, %p155
      %p157 = scmp.ne.s32.totalorder %s143, %s144
      %p158 = scmp.eq.s32.totalorder %s22, 1
      %p159 = por %p157, %p158
      %p161 = scmp.ne.s32.totalorder %s144, %s160
      %p162 = scmp.eq.s32.totalorder %s22, 0
      %p163 = por %p161, %p162
      %p164 = scmp.le.s32.totalorder 1, %s16
      %p165 = scmp.lt.s32.totalorder %s16, 3
      %p166 = pnand %p164, %p165
      %p167 = pneg %p166
      // Predicated region
      $region9: #{tpu_custom_call.1} parent=5 // pred_check
        _
      $region10: #{tpu_custom_call.1} parent=5 // pred_check_branch
        %169 = sbr.rel (%p166) target = $region12
      $region11: #{tpu_custom_call.1} parent=5 // pred_region
        %s170 = ssub.s32 %s16, 1
        // Predicated region
        $region13: #{tpu_custom_call.1} parent=11 // pred_check
          %p171 = pneg %p107
        $region14: #{tpu_custom_call.1} parent=11 // pred_check_branch
          %173 = sbr.rel (%p171) target = $region16
        $region15: #{tpu_custom_call.1} parent=11 // pred_region
          _
        $region16: #{tpu_custom_call.1} parent=11 // pred_fallthru
          _
        // Predicated region
        $region17: #{tpu_custom_call.1} parent=11 // pred_check
          %p174 = pneg %p128
        $region18: #{tpu_custom_call.1} parent=11 // pred_check_branch
          %176 = sbr.rel (%p174) target = $region20
        $region19: #{tpu_custom_call.1} parent=11 // pred_region
          _
        $region20: #{tpu_custom_call.1} parent=11 // pred_fallthru
          _
      $region12: #{tpu_custom_call.1} parent=5 // pred_fallthru
        _
      %p177 = scmp.lt.s32.totalorder %s16, 2
      // Predicated region
      $region21: #{tpu_custom_call.1} parent=5 // pred_check
        %p178 = pneg %p177
      $region22: #{tpu_custom_call.1} parent=5 // pred_check_branch
        %180 = sbr.rel (%p178) target = $region24
      $region23: #{tpu_custom_call.1} parent=5 // pred_region
        // Predicated region
        $region25: #{tpu_custom_call.1} parent=23 // pred_check
          %p181 = pneg %p50
        $region26: #{tpu_custom_call.1} parent=23 // pred_check_branch
          %183 = sbr.rel (%p181) target = $region28
        $region27: #{tpu_custom_call.1} parent=23 // pred_region
          %s184 = smul.u32 2, %s24
          %p185 = scmp.lt.s32.totalorder %s23, 1
          %s186 = scalar_select %p185, %s23, 1
          %p187 = scmp.lt.s32.totalorder %s184, 3
          %s188 = scalar_select %p187, %s184, 3
          %s189 = smul.addr %s186, 4
          %s190 = sadd.s32 %s188, %s189
          %s191 = smul.addr %s190, 2
          %s192 = scalar_lea.vmem %s0, %s191
          %s193 = smul.u32 2, %s24
        $region28: #{tpu_custom_call.1} parent=23 // pred_fallthru
          _
        // Predicated region
        $region29: #{tpu_custom_call.1} parent=23 // pred_check
          %p194 = pneg %p80
        $region30: #{tpu_custom_call.1} parent=23 // pred_check_branch
          %196 = sbr.rel (%p194) target = $region32
        $region31: #{tpu_custom_call.1} parent=23 // pred_region
          %s197 = sand.u32 %s70, 1
          %s198 = scalar_lea.sflag [#allocation3], %s197
          %s199 = sand.u32 %s70, 1
          %s200 = smul.addr %s199, 4
          %s201 = scalar_lea.vmem [#allocation2], %s200
          %s202 = sadd.s32 %s24, 1
          %s203 = smul.u32 2, %s202
          %s205 = ssub.s32 64, 64
          %206 = vsyncadd %s198, %s205
          %s207 = smul.addr %s23, 4
          %s208 = sadd.s32 %s203, %s207
          %s209 = smul.addr %s208, 32
          %s210 = scalar_lea.hbm %s1, %s209
          %s212 = sshll.u32 %s201, 4
          %s213 = int_to_ptr.vmem [resolvable:$true] %s212
          %215 = dma.hbm_to_vmem [thread:$0]  %s210, 64, %s213, %s198
        $region32: #{tpu_custom_call.1} parent=23 // pred_fallthru
          _
      $region24: #{tpu_custom_call.1} parent=5 // pred_fallthru
        _
      %p216 = scmp.le.s32.totalorder 1, %s16
      %p217 = scmp.lt.s32.totalorder %s16, 3
      %p218 = pnand %p216, %p217
      %p219 = pneg %p218
      // Predicated region
      $region33: #{tpu_custom_call.1} parent=5 // pred_check
        _
      $region34: #{tpu_custom_call.1} parent=5 // pred_check_branch
        %221 = sbr.rel (%p218) target = $region36
      $region35: #{tpu_custom_call.1} parent=5 // pred_region
        %s222 = ssub.s32 %s16, 1
        %s223 = sand.u32 %s73, 1
        %s224 = scalar_lea.sflag [#allocation3], %s223
        %s225 = sand.u32 %s73, 1
        %s226 = smul.addr %s225, 4
        %s227 = scalar_lea.vmem [#allocation2], %s226
        // Predicated region
        $region37: #{tpu_custom_call.1} parent=35 // pred_check
          %p228 = pneg %p86
        $region38: #{tpu_custom_call.1} parent=35 // pred_check_branch
          %230 = sbr.rel (%p228) target = $region40
        $region39: #{tpu_custom_call.1} parent=35 // pred_region
          %231 = dma.done %s224, 64
        $region40: #{tpu_custom_call.1} parent=35 // pred_fallthru
          _
        %s232 = smul.u32 2, %s26
        %p233 = scmp.lt.s32.totalorder %s25, 1
        %s234 = scalar_select %p233, %s25, 1
        %p235 = scmp.lt.s32.totalorder %s232, 3
        %s236 = scalar_select %p235, %s232, 3
        %s237 = smul.addr %s234, 4
        %s238 = sadd.s32 %s236, %s237
        %s239 = smul.addr %s238, 2
        %s240 = scalar_lea.vmem %s0, %s239
        %p241 = pneg %p56
        %p242 = pneg %p53
        %s243 = sand.u32 %s73, 1
        %s244 = scalar_lea.sflag [#allocation3], %s243
        %s245 = sand.u32 %s73, 1
        %s246 = smul.addr %s245, 4
        %s247 = scalar_lea.vmem [#allocation2], %s246
        %p248 = pneg %p86
        %p249 = pneg %p83
        %p250 = pneg %p107
        %p251 = pneg %p104
        %p252 = pneg %p128
        %p253 = pneg %p125
        %p254 = pneg %p156
        %p255 = pneg %p153
        %s256 = sand.u32 %s143, 1
        %s257 = scalar_lea.sflag [#allocation4], %s256
        %s258 = sand.u32 %s143, 1
        %s259 = smul.addr %s258, 32
        %s260 = scalar_lea.vmem [#allocation5], %s259
        %s261 = smul.u32 2, %s26
        %p262 = scmp.lt.s32.totalorder %s25, 1
        %s263 = scalar_select %p262, %s25, 1
        %p264 = scmp.lt.s32.totalorder %s261, 3
        %s265 = scalar_select %p264, %s261, 3
        %s266 = smul.addr %s263, 4
        %s267 = sadd.s32 %s265, %s266
        %s268 = smul.addr %s267, 2
        %s269 = scalar_lea.vmem %s0, %s268
        %s270 = smul.u32 2, %s26
        %s271 = sadd.s32 %s26, 1
        %s272 = smul.u32 2, %s271
        %s273 = smul.u32 2, %s26
        %v277 = vld [vmem:[%s269] sm:$0xf]
        %v278 = vld [vmem:[%s227] sm:$0xf]
        %v281 = vunpack.c.l.s4 1983009808
        %v282 = vunpack.c.0.s8 %v281
        %v283 = vlaneseq
        %v284 = vshrl.u32 %v283, 7
        %v285 = vsub.s32 %v282, %v284
        %v286 = vrot.slane %v277, %v285
        %v287 = vcombine.high %v286, %v286
        %v292 = vunpack.c.l.s4 1983009808
        %v293 = vunpack.c.0.s8 %v292
        %v294 = vlaneseq
        %v295 = vshrl.u32 %v294, 7
        %v296 = vsub.s32 %v293, %v295
        %v297 = vrot.slane %v278, %v296
        %v299 = vlaneseq
        %v300 = vand.u32 %v299, 127
        %v301 = vadd.s32 %v300, 128
        %vm302 = vcmp.lt.s32.totalorder %v300, 0
        %v303 = vsub.s32 0, %v300
        %v304 = vsel %vm302, %v303, %v300
        %v305 = vshrl.u32 %v304, 4
        %v306 = vand.u32 %v304, 15
        %v307 = vsub.s32 0, %v306
        %v308 = vsel %vm302, %v307, %v306
        %vm309 = vcmp.lt.s32.totalorder %v301, 0
        %v310 = vsub.s32 0, %v301
        %v311 = vsel %vm309, %v310, %v301
        %v312 = vshrl.u32 %v311, 4
        %v313 = vand.u32 %v311, 15
        %v314 = vsub.s32 0, %v313
        %v315 = vsel %vm309, %v314, %v313
        %vm316 = vcmp.ne.s32.totalorder %v308, 0
        %vm317 = vcmp.ne.s32.totalorder %v315, 0
        %vm318 = vcmp.lt.s32.totalorder %v308, 0
        %vm319 = vcmp.lt.s32.totalorder %v315, 0
        %vm320 = vmand %vm318, %vm316
        %vm321 = vmand %vm319, %vm317
        %v322 = vadd.s32 %v308, 16
        %v323 = vadd.s32 %v315, 16
        %v324 = vsel %vm320, %v322, %v308
        %v325 = vsel %vm321, %v323, %v315
        %vm326 = vcmp.ne.s32.totalorder %v324, 0
        %vm327 = vcmp.ne.s32.totalorder %v325, 0
        %vm328 = vcmp.ne.s32.totalorder %v324, 15
        %vm329 = vcmp.ne.s32.totalorder %v325, 15
        %vm330 = vmpackc.low %vm327, %vm326
        %v331 = vsel %vm330, 65537, 0
        %v332 = vlaneseq
        %v333 = vshrl.u32 %v332, 7
        %v334 = vsub.s32 0, %v333
        %v335 = vrot.slane %v331, %v334
        %v336 = vlaneseq
        %v337 = vshrl.u32 %v336, 7
        %v338 = vsub.s32 4, %v337
        %v339 = vrot.slane %v331, %v338
        %vm340 = vcmp.ne.s16.totalorder %v335, 0
        %vm341 = vcmp.ne.s16.totalorder %v339, 0
        %v342 = vsel %vm340, %v286, 0
        %v343 = vsel %vm341, %v287, 0
        %vm344 = vmpackc.low %vm329, %vm328
        %v345 = vsel %vm344, 65537, 0
        %v346 = vlaneseq
        %v347 = vshrl.u32 %v346, 7
        %v348 = vsub.s32 0, %v347
        %v349 = vrot.slane %v345, %v348
        %v350 = vlaneseq
        %v351 = vshrl.u32 %v350, 7
        %v352 = vsub.s32 4, %v351
        %v353 = vrot.slane %v345, %v352
        %354 = vrot.lane.b32.xlu0 %v349, 2
        %v355 = vpop.permute.xlu0 %354
        %356 = vrot.lane.b32.xlu0 %v353, 2
        %v357 = vpop.permute.xlu0 %356
        %vm358 = vcmask 15360
        %v359 = vsel %vm358, %v355, %v357
        %vm360 = vcmp.ne.s16.totalorder %v355, 0
        %vm361 = vcmp.ne.s16.totalorder %v359, 0
        %vm362 = vcmp.ne.s16.totalorder %v357, 0
        %v363 = vsel %vm360, %v286, 0
        %v364 = vsel %vm361, %v287, 0
        %v365 = vsel %vm362, %v297, 0
        %366 = vrot.lane.b32.xlu0 %v335, 16
        %v367 = vpop.permute.xlu0 %366
        %368 = vrot.lane.b32.xlu0 %v339, 16
        %v369 = vpop.permute.xlu0 %368
        %vm370 = vcmask 130048
        %v371 = vsel %vm370, %v367, %v369
        %vm372 = vcmp.ne.s16.totalorder %v367, 0
        %vm373 = vcmp.ne.s16.totalorder %v371, 0
        %vm374 = vcmp.ne.s16.totalorder %v369, 0
        %v375 = vsel %vm372, %v286, 0
        %v376 = vsel %vm373, %v287, 0
        %v377 = vsel %vm374, %v297, 0
        %378 = vrot.lane.b32.xlu0 %v349, 18
        %v379 = vpop.permute.xlu0 %378
        %380 = vrot.lane.b32.xlu0 %v353, 18
        %v381 = vpop.permute.xlu0 %380
        %vm382 = vcmask 146432
        %v383 = vsel %vm382, %v379, %v381
        %vm384 = vcmp.ne.s16.totalorder %v379, 0
        %vm385 = vcmp.ne.s16.totalorder %v383, 0
        %vm386 = vcmp.ne.s16.totalorder %v381, 0
        %v387 = vsel %vm384, %v286, 0
        %v388 = vsel %vm385, %v287, 0
        %v389 = vsel %vm386, %v297, 0
        %390 = vrot.lane.b32.xlu0 %v335, 32
        %v391 = vpop.permute.xlu0 %390
        %392 = vrot.lane.b32.xlu0 %v339, 32
        %v393 = vpop.permute.xlu0 %392
        %vm394 = vcmask 261120
        %v395 = vsel %vm394, %v391, %v393
        %vm396 = vcmp.ne.s16.totalorder %v391, 0
        %vm397 = vcmp.ne.s16.totalorder %v395, 0
        %vm398 = vcmp.ne.s16.totalorder %v393, 0
        %v399 = vsel %vm396, %v286, 0
        %v400 = vsel %vm397, %v287, 0
        %v401 = vsel %vm398, %v297, 0
        %402 = vrot.lane.b32.xlu0 %v349, 34
        %v403 = vpop.permute.xlu0 %402
        %404 = vrot.lane.b32.xlu0 %v353, 34
        %v405 = vpop.permute.xlu0 %404
        %vm406 = vcmask 277504
        %v407 = vsel %vm406, %v403, %v405
        %vm408 = vcmp.ne.s16.totalorder %v403, 0
        %vm409 = vcmp.ne.s16.totalorder %v407, 0
        %vm410 = vcmp.ne.s16.totalorder %v405, 0
        %v411 = vsel %vm408, %v286, 0
        %v412 = vsel %vm409, %v287, 0
        %v413 = vsel %vm410, %v297, 0
        %v414 = vrot.slane %v286, 6
        %v415 = vrot.slane %v287, 6
        %v416 = vrot.slane %v297, 6
        %417 = vrot.lane.b32.xlu0 %v414, 127
        %v418 = vpop.permute.xlu0 %417
        %419 = vrot.lane.b32.xlu0 %v415, 127
        %v420 = vpop.permute.xlu0 %419
        %421 = vrot.lane.b32.xlu0 %v416, 127
        %v422 = vpop.permute.xlu0 %421
        %vm423 = vcmask 1039360
        %v424 = vsel %vm423, %v418, %v420
        %v425 = vsel %vm423, %v420, %v422
        %v429 = vrot.slane %v363, 4
        %v430 = vrot.slane %v364, 4
        %v431 = vrot.slane %v365, 4
        %432 = vrot.lane.b32.xlu0 %v429, 126
        %v433 = vpop.permute.xlu0 %432
        %434 = vrot.lane.b32.xlu0 %v430, 126
        %v435 = vpop.permute.xlu0 %434
        %436 = vrot.lane.b32.xlu0 %v431, 126
        %v437 = vpop.permute.xlu0 %436
        %vm438 = vcmask 1031168
        %v439 = vsel %vm438, %v433, %v435
        %v440 = vsel %vm438, %v435, %v437
        %v444 = vrot.slane %v375, 2
        %v445 = vrot.slane %v376, 2
        %v446 = vrot.slane %v377, 2
        %447 = vrot.lane.b32.xlu0 %v444, 112
        %v448 = vpop.permute.xlu0 %447
        %449 = vrot.lane.b32.xlu0 %v445, 112
        %v450 = vpop.permute.xlu0 %449
        %451 = vrot.lane.b32.xlu0 %v446, 112
        %v452 = vpop.permute.xlu0 %451
        %vm453 = vcmask 916480
        %v454 = vsel %vm453, %v448, %v450
        %v455 = vsel %vm453, %v450, %v452
        %456 = vrot.lane.b32.xlu0 %v286, 111
        %v457 = vpop.permute.xlu0 %456
        %458 = vrot.lane.b32.xlu0 %v287, 111
        %v459 = vpop.permute.xlu0 %458
        %460 = vrot.lane.b32.xlu0 %v297, 111
        %v461 = vpop.permute.xlu0 %460
        %vm462 = vcmask 908288
        %v463 = vsel %vm462, %v457, %v459
        %v464 = vsel %vm462, %v459, %v461
        %v468 = vrot.slane %v387, 6
        %v469 = vrot.slane %v388, 6
        %v470 = vrot.slane %v389, 6
        %471 = vrot.lane.b32.xlu0 %v468, 110
        %v472 = vpop.permute.xlu0 %471
        %473 = vrot.lane.b32.xlu0 %v469, 110
        %v474 = vpop.permute.xlu0 %473
        %475 = vrot.lane.b32.xlu0 %v470, 110
        %v476 = vpop.permute.xlu0 %475
        %vm477 = vcmask 900096
        %v478 = vsel %vm477, %v472, %v474
        %v479 = vsel %vm477, %v474, %v476
        %v483 = vrot.slane %v399, 4
        %v484 = vrot.slane %v400, 4
        %v485 = vrot.slane %v401, 4
        %486 = vrot.lane.b32.xlu0 %v483, 96
        %v487 = vpop.permute.xlu0 %486
        %488 = vrot.lane.b32.xlu0 %v484, 96
        %v489 = vpop.permute.xlu0 %488
        %490 = vrot.lane.b32.xlu0 %v485, 96
        %v491 = vpop.permute.xlu0 %490
        %vm492 = vcmask 785408
        %v493 = vsel %vm492, %v487, %v489
        %v494 = vsel %vm492, %v489, %v491
        %v495 = vrot.slane %v286, 2
        %v496 = vrot.slane %v287, 2
        %v497 = vrot.slane %v297, 2
        %498 = vrot.lane.b32.xlu0 %v495, 95
        %v499 = vpop.permute.xlu0 %498
        %500 = vrot.lane.b32.xlu0 %v496, 95
        %v501 = vpop.permute.xlu0 %500
        %502 = vrot.lane.b32.xlu0 %v497, 95
        %v503 = vpop.permute.xlu0 %502
        %vm504 = vcmask 777216
        %v505 = vsel %vm504, %v499, %v501
        %v506 = vsel %vm504, %v501, %v503
        %510 = vrot.lane.b32.xlu0 %v411, 94
        %v511 = vpop.permute.xlu0 %510
        %512 = vrot.lane.b32.xlu0 %v412, 94
        %v513 = vpop.permute.xlu0 %512
        %514 = vrot.lane.b32.xlu0 %v413, 94
        %v515 = vpop.permute.xlu0 %514
        %vm516 = vcmask 769024
        %v517 = vsel %vm516, %v511, %v513
        %v518 = vsel %vm516, %v513, %v515
        %vm519 = vcmask 1041408
        %v522 = vsel %vm519, %v342, %v424
        %v525 = vsel %vm519, %v343, %v425
        %vm526 = vcmask 1043456
        %v528 = vsel %vm526, %v522, %v439
        %v530 = vsel %vm526, %v525, %v440
        %vm531 = vcmask 1045504
        %v533 = vsel %vm531, %v528, %v454
        %v536 = vsel %vm531, %v530, %v455
        %v540 = vsel %vm519, %v463, %v478
        %v543 = vsel %vm519, %v464, %v479
        %v545 = vsel %vm526, %v540, %v493
        %v547 = vsel %vm526, %v543, %v494
        %v549 = vsel %vm531, %v545, %v505
        %v552 = vsel %vm531, %v547, %v506
        %v554 = vld [vmem:[%s2] sm:$0xf]
        %v555 = vld [vmem:[%s2 + $0x4] sm:$0xf]
        %v556 = vld [vmem:[%s3] sm:$0xff]
        %v557 = vld [vmem:[%s3 + $0x8] sm:$0xff]
        %559 = vset.pattern.permute.xlu0 0
        %560 = vperm.xlu0 %559, %v556
        %v561 = vpop.permute.xlu0 %560
        %564 = vset.pattern.permute.xlu0 0
        %565 = vperm.xlu0 %564, %v557
        %v566 = vpop.permute.xlu0 %565
        %v570 = vunpack.c.l.b16 %v554
        %v571 = vunpack.c.l.b16 %v555
        %v572 = vpack.c.b16 %v571, %v570
        %vm573 = vcmask 293888
        %v575 = vsel %vm573, %v572, 0
        %v578 = vsel %vm519, %v517, 0
        %v581 = vsel %vm519, %v518, 0
        %583 = vmatprep.subr.bf16.mxu0 %v536
        %584 = vmatpush1.bf16.msra.mxu0 %v533
        %585 = vmatprep.subr.bf16.mxu0 %v552
        %586 = vmatpush1.bf16.msra.mxu0 %v549
        %587 = vmatprep.subr.bf16.mxu0 %v581
        %588 = vmatpush1.bf16.msra.mxu0 %v578
        %589 = vmatprep.subr.bf16.mxu0 0
        %590 = vmatpush1.bf16.msra.mxu0 0
        %591 = vmatprep.subr.bf16.mxu0 0
        %592 = vmatpush1.bf16.msra.mxu0 0
        %593 = vmatprep.subr.bf16.mxu0 0
        %594 = vmatpush1.bf16.msra.mxu0 0
        %595 = vmatprep.subr.bf16.mxu0 0
        %596 = vmatpush1.bf16.msra.mxu0 0
        %597 = vmatprep.subr.bf16.mxu0 0
        %598 = vmatpush1.bf16.msra.mxu0 0
        %599 = vmatprep.subr.bf16.mxu0 0
        %600 = vmatpush1.bf16.msra.mxu0 0
        %601 = vmatprep.subr.bf16.mxu0 0
        %602 = vmatpush1.bf16.msra.mxu0 0
        %603 = vmatprep.subr.bf16.mxu0 0
        %604 = vmatpush1.bf16.msra.mxu0 0
        %605 = vmatprep.subr.bf16.mxu0 0
        %606 = vmatpush1.bf16.msra.mxu0 0
        %607 = vmatprep.subr.bf16.mxu0 0
        %608 = vmatpush1.bf16.msra.mxu0 0
        %609 = vmatprep.subr.bf16.mxu0 0
        %610 = vmatpush1.bf16.msra.mxu0 0
        %611 = vmatprep.subr.bf16.mxu0 0
        %612 = vmatpush1.bf16.msra.mxu0 0
        %613 = vmatprep.subr.bf16.mxu0 0
        %614 = vmatpush1.bf16.msra.mxu0 0
        %615 = vmatprep.mubr.bf16.mxu0 0
        %616 = vmatmul.mubr.bf16.gmra.mrb[0].mxu0 %v575
        %v617 = vpop.f32.mrb[0].mxu0
        %v618 = vadd.f32 %v561, %v617
        %v619 = vpop.f32.mrb[0].mxu0
        %v620 = vadd.f32 %v561, %v619
        %v621 = vpop.f32.mrb[0].mxu0
        %v622 = vadd.f32 %v566, %v621
        %v623 = vpop.f32.mrb[0].mxu0
        %v624 = vadd.f32 %v566, %v623
        %625 = vdwg.mxu0
        %626 = vst [vmem:[%s260] sm:$0xff] %v618
        %627 = vst [vmem:[%s260 + $0x8] sm:$0xff] %v620
        %628 = vst [vmem:[%s260 + $0x10] sm:$0xff] %v622
        %629 = vst [vmem:[%s260 + $0x18] sm:$0xff] %v624
        %s630 = sand.u32 %s143, 1
        %s631 = scalar_lea.sflag [#allocation4], %s630
        %s632 = sand.u32 %s143, 1
        %s633 = smul.addr %s632, 32
        %s634 = scalar_lea.vmem [#allocation5], %s633
        // Predicated region
        $region41: #{tpu_custom_call.1} parent=35 // pred_check
          %p635 = pneg %p153
        $region42: #{tpu_custom_call.1} parent=35 // pred_check_branch
          %637 = sbr.rel (%p635) target = $region44
        $region43: #{tpu_custom_call.1} parent=35 // pred_region
          %s638 = smul.u32 2, %s26
          %s640 = ssub.s32 512, 512
          %641 = vsyncadd %s631, %s640
          %s642 = smul.addr %s25, 4
          %s643 = sadd.s32 %s638, %s642
          %s644 = smul.addr %s643, 128
          %s645 = scalar_lea.hbm %s4, %s644
          %s646 = sshll.u32 %s634, 4
          %s647 = int_to_ptr.vmem [resolvable:$true] %s646
          %652 = dma.vmem_to_hbm [thread:$0]  %s647, 512, %s645, %s631, 256, 256, 16
        $region44: #{tpu_custom_call.1} parent=35 // pred_fallthru
          _
      $region36: #{tpu_custom_call.1} parent=5 // pred_fallthru
        _
      %p653 = scmp.le.s32.totalorder 2, %s16
      // Predicated region
      $region45: #{tpu_custom_call.1} parent=5 // pred_check
        %p654 = pneg %p653
      $region46: #{tpu_custom_call.1} parent=5 // pred_check_branch
        %656 = sbr.rel (%p654) target = $region48
      $region47: #{tpu_custom_call.1} parent=5 // pred_region
        %s657 = ssub.s32 %s16, 2
        // Predicated region
        $region49: #{tpu_custom_call.1} parent=47 // pred_check
          %p658 = pneg %p159
        $region50: #{tpu_custom_call.1} parent=47 // pred_check_branch
          %660 = sbr.rel (%p658) target = $region52
        $region51: #{tpu_custom_call.1} parent=47 // pred_region
          %s661 = sand.u32 %s144, 1
          %s662 = scalar_lea.sflag [#allocation4], %s661
          %s663 = sand.u32 %s144, 1
          %s664 = smul.addr %s663, 32
          %s665 = scalar_lea.vmem [#allocation5], %s664
          %666 = dma.done %s662, 512
        $region52: #{tpu_custom_call.1} parent=47 // pred_fallthru
          _
      $region48: #{tpu_custom_call.1} parent=5 // pred_fallthru
        _
    $region6: #{tpu_custom_call.1} parent=1 // loop_footer
      %s20 = sadd.s32 1, %s16
    $region7: #{tpu_custom_call.1} parent=1 // loop_footer_branch
      %15 = sbr.rel target = $region3
    $region8: #{tpu_custom_call.1} parent=1 // loop_exit
      _
    %667 = vsyncpa [#allocation3], 1
    %s668 = scalar_lea.sflag [#allocation3], 1
    %669 = vsyncpa %s668, 1
    %670 = vsyncpa [#allocation4], 1
    %s671 = scalar_lea.sflag [#allocation4], 1
    %672 = vsyncpa %s671, 1

</llo_original>
